<compile_context>
chip_gen: v7x
topology: tpu7x:2x2x1
jax: 0.10.0
libtpu: 0.0.40
codegen_flags: <defaults>
</compile_context>

<pallas_src>
import jax
import jax.numpy as jnp
from jax.experimental import pallas as pl
from jax.experimental.pallas import tpu as pltpu


def _round_up(v, m):
    return ((v + m - 1) // m) * m


def _round_down(v, m):
    return max(m, (v // m) * m)


def _vmem_capacity_bytes():
    """Physical VMEM of the attached TPU; conservative v7x default if unknown."""
    try:
        info = pltpu.get_tpu_info()
        cap = int(getattr(info, "vmem_capacity_bytes", 0) or 0)
        if cap > 0:
            return cap
    except Exception:
        pass
    return 64 << 20


# ----------------------------- kernels --------------------------------------

def _logreg_kernel_fused(x_ref, wt_ref, b_ref, o_ref):
    # Single-K-block fast path: straight-line logits -> log_softmax -> store.
    logits = jnp.dot(x_ref[...], wt_ref[...],
                     preferred_element_type=jnp.float32) + b_ref[...]
    m = jnp.max(logits, axis=-1, keepdims=True)
    shifted = logits - m
    lse = jnp.log(jnp.sum(jnp.exp(shifted), axis=-1, keepdims=True))
    o_ref[...] = (shifted - lse).astype(o_ref.dtype)


def _logreg_kernel_ksplit(x_ref, wt_ref, b_ref, o_ref, acc_ref):
    k = pl.program_id(1)

    @pl.when(k == 0)
    def _init():
        # Seed the accumulator with the bias instead of zeros: removes the
        # separate zero-fill and the `+ bias` pass at finalize time.
        acc_ref[...] = jnp.broadcast_to(
            b_ref[...].astype(jnp.float32), acc_ref.shape)

    # Partial logits for this K slice (MXU, f32 accumulation).
    acc_ref[...] += jnp.dot(x_ref[...], wt_ref[...],
                            preferred_element_type=jnp.float32)

    @pl.when(k == pl.num_programs(1) - 1)
    def _finalize():
        logits = acc_ref[...]
        m = jnp.max(logits, axis=-1, keepdims=True)
        shifted = logits - m
        lse = jnp.log(jnp.sum(jnp.exp(shifted), axis=-1, keepdims=True))
        o_ref[...] = (shifted - lse).astype(o_ref.dtype)


# ----------------------------- wrappers -------------------------------------

def logistic_regression_forward_wt(x, weight_t, bias, *, block_n=None, block_k=None):
    """Production entry point.

    x: [N, d_in], weight_t: [d_in, d_out] (pre-transposed), bias: [d_out].
    Returns [N, d_out] log-probs (log_softmax over the class axis).
    """
    n, d_in = x.shape
    d_out = weight_t.shape[1]

    itemsize = jnp.dtype(x.dtype).itemsize
    out_itemsize = itemsize
    # Sub-32-bit dtypes pack along sublanes: f32 -> 8, bf16 -> 16, int8 -> 32.
    sublane = max(8, 32 // itemsize)

    # --- K (feature) tiling: only split when d_in is wide and splits cleanly
    #     into 128-lane-aligned chunks, so boundary K-blocks never mix padded
    #     garbage into the accumulator.
    if block_k is None:
        block_k = 512 if (d_in > 2048 and d_in % 512 == 0) else d_in
    if block_k != d_in and (d_in % block_k != 0 or block_k % 128 != 0):
        block_k = d_in
    num_k = d_in // block_k

    # --- Per-generation sizing. 128-MiB-VMEM parts (v5e/v6e): ~8 MiB x tiles,
    #     <=96 MiB scoped limit. 64-MiB v7x: ~4 MiB tiles, <=48 MiB limit.
    vmem_cap = _vmem_capacity_bytes()
    big_vmem = vmem_cap >= (100 << 20)
    target_x_tile_bytes = (8 << 20) if big_vmem else (4 << 20)
    vmem_ceiling = (96 << 20) if big_vmem else (48 << 20)

    # VMEM footprint bookkeeping (double-buffered inputs/outputs + accumulator).
    fixed_bytes = 2 * block_k * d_out * itemsize + 2 * d_out * itemsize
    per_row_bytes = (2 * block_k * itemsize + 2 * d_out * out_itemsize
                     + (d_out * 4 if num_k > 1 else 0))

    # --- Row tiling: sized from the tile-byte target (no fixed row cap) so
    #     narrow-d_in workloads still get multi-MiB x tiles; capped so the
    #     whole footprint fits VMEM and, for large N, so there are >= 4 row
    #     steps (pipelining + megacore sharding) without shrinking the x tile
    #     below ~1 MiB.
    if block_n is None:
        bn = target_x_tile_bytes // max(1, block_k * itemsize)
        vmem_row_cap = max(
            sublane,
            (int(0.75 * vmem_ceiling) - fixed_bytes) // max(1, per_row_bytes))
        bn = min(bn, vmem_row_cap)
        four_step_rows = _round_up(pl.cdiv(n, 4), sublane)
        one_mib_rows = max(sublane, (1 << 20) // max(1, block_k * itemsize))
        bn = min(bn, max(four_step_rows, one_mib_rows))
        block_n = max(sublane, bn)
    block_n = min(block_n, n)
    if block_n < n:
        block_n = _round_down(block_n, sublane)   # (8,128)/packing constraint

    b2 = bias.reshape(1, d_out)

    num_rows = pl.cdiv(n, block_n)
    vmem_need = fixed_bytes + block_n * per_row_bytes
    vmem_limit = int(min(max(2 * vmem_need, 16 << 20), vmem_ceiling))

    # Advisory cost estimate: the weight block index changes at every row-step
    # boundary when K is split, so it is re-read once per row step.
    wt_reads = 1 if num_k == 1 else num_rows
    cost = pl.CostEstimate(
        flops=2 * n * d_in * d_out,
        transcendentals=n * d_out + n,            # exp per logit + log per row
        bytes_accessed=(x.size * itemsize
                        + weight_t.size * itemsize * wt_reads
                        + b2.size * itemsize
                        + n * d_out * out_itemsize),
    )

    out_shape = jax.ShapeDtypeStruct((n, d_out), x.dtype)

    # TODO(synk): lane-dense packing/padding of d_out toward 128 (with -inf
    # bias on padded classes) only pays off if d_out grows to ~64-128+; at tiny
    # d_out the softmax/store path hides under the x-read DMA, so it is skipped.

    if num_k == 1:
        # Common fast path: no accumulator scratch, single straight-line block.
        return pl.pallas_call(
            _logreg_kernel_fused,
            out_shape=out_shape,
            grid_spec=pltpu.PrefetchScalarGridSpec(
                num_scalar_prefetch=0,
                grid=(num_rows,),
                in_specs=[
                    pl.BlockSpec((block_n, d_in), lambda i: (i, 0)),   # x
                    pl.BlockSpec((d_in, d_out), lambda i: (0, 0)),     # W^T
                    pl.BlockSpec((1, d_out), lambda i: (0, 0)),        # bias
                ],
                out_specs=pl.BlockSpec((block_n, d_out), lambda i: (i, 0)),
            ),
            compiler_params=pltpu.CompilerParams(
                dimension_semantics=("parallel",),
                vmem_limit_bytes=vmem_limit,
            ),
            cost_estimate=cost,
        )(x, weight_t, b2)

    return pl.pallas_call(
        _logreg_kernel_ksplit,
        out_shape=out_shape,
        grid_spec=pltpu.PrefetchScalarGridSpec(
            num_scalar_prefetch=0,
            grid=(num_rows, num_k),
            in_specs=[
                pl.BlockSpec((block_n, block_k), lambda i, k: (i, k)),   # x
                pl.BlockSpec((block_k, d_out), lambda i, k: (k, 0)),     # W^T
                pl.BlockSpec((1, d_out), lambda i, k: (0, 0)),           # bias
            ],
            out_specs=pl.BlockSpec((block_n, d_out), lambda i, k: (i, 0)),
            scratch_shapes=[pltpu.VMEM((block_n, d_out), jnp.float32)],
        ),
        compiler_params=pltpu.CompilerParams(
            dimension_semantics=("parallel", "arbitrary"),
            vmem_limit_bytes=vmem_limit,
        ),
        cost_estimate=cost,
    )(x, weight_t, b2)


def logistic_regression_forward(x, weight, bias, **kwargs):
    """Convenience wrapper matching nn.Linear's [d_out, d_in] weight layout.

    In production store the weight pre-transposed as [d_in, d_out] and call
    `logistic_regression_forward_wt` directly to avoid the per-call transpose.
    """
    return logistic_regression_forward_wt(x, weight.T, bias, **kwargs)


if __name__ == "__main__":
    D_IN, D_OUT = 32, 16
    key = jax.random.PRNGKey(0)
    k1, k2, k3, k4, k5, k6, k7 = jax.random.split(key, 7)

    # Case 1: exactly the module's init (zero weight & bias), tiny batch.
    N1 = 8
    x1 = jax.random.normal(k1, (N1, D_IN), dtype=jnp.float32)
    w0 = jnp.zeros((D_OUT, D_IN), dtype=jnp.float32)
    b0 = jnp.zeros((D_OUT,), dtype=jnp.float32)
    out1 = jax.block_until_ready(logistic_regression_forward(x1, w0, b0))
    ref1 = jax.nn.log_softmax(x1 @ w0.T + b0, axis=-1)
    assert out1.shape == (N1, D_OUT)
    assert jnp.allclose(out1, ref1, atol=1e-5), "mismatch (zero params)"

    # Case 2: multi-step pipelined row grid (4 row steps, partial tail block),
    # nonzero parameters, via the pre-transposed production entry point.
    N2 = 200
    x2 = jax.random.normal(k2, (N2, D_IN), dtype=jnp.float32)
    w2 = 0.1 * jax.random.normal(k3, (D_OUT, D_IN), dtype=jnp.float32)
    b2 = 0.1 * jax.random.normal(k4, (D_OUT,), dtype=jnp.float32)
    out2 = jax.block_until_ready(
        logistic_regression_forward_wt(x2, w2.T, b2, block_n=64))
    ref2 = jax.nn.log_softmax(x2 @ w2.T + b2, axis=-1)
    assert out2.shape == (N2, D_OUT)
    assert jnp.allclose(out2, ref2, atol=1e-4), "mismatch (random params)"

    # Case 3: exercise the K-split accumulator path (block_k=128 < d_in=256).
    N3, D_IN3 = 64, 256
    x3 = jax.random.normal(k5, (N3, D_IN3), dtype=jnp.float32)
    w3 = 0.05 * jax.random.normal(k6, (D_OUT, D_IN3), dtype=jnp.float32)
    b3 = 0.05 * jax.random.normal(k7, (D_OUT,), dtype=jnp.float32)
    out3 = jax.block_until_ready(
        logistic_regression_forward(x3, w3, b3, block_k=128))
    ref3 = jax.nn.log_softmax(x3 @ w3.T + b3, axis=-1)
    assert out3.shape == (N3, D_OUT)
    assert jnp.allclose(out3, ref3, atol=1e-4), "mismatch (K-split path)"

    print("KERNEL_OK")
</pallas_src>

<mosaic_0001>
module attributes {stable_mosaic.version = 11 : i64} {
  func.func @_logreg_kernel_fused(%arg0: i32, %arg1: memref<8x32xf32, #tpu.memory_space<vmem>>, %arg2: memref<32x16xf32, #tpu.memory_space<vmem>>, %arg3: memref<1x16xf32, #tpu.memory_space<vmem>>, %arg4: memref<8x16xf32, #tpu.memory_space<vmem>>) attributes {dimension_semantics = [#tpu.dimension_semantics<parallel>], iteration_bounds = array<i64: 1>, scalar_prefetch = 0 : i64, scratch_operands = 0 : i64, tpu.core_type = #tpu.core_type<tc>, window_params = [{transform_indices = @transform_0, window_bounds = array<i64: 8, 32>}, {pipeline_mode = #tpu.pipeline_mode<synchronous>, transform_indices = @transform_1, window_bounds = array<i64: 32, 16>}, {pipeline_mode = #tpu.pipeline_mode<synchronous>, transform_indices = @transform_2, window_bounds = array<i64: 1, 16>}, {transform_indices = @transform_3, window_bounds = array<i64: 8, 16>}]} {
    %c0 = arith.constant 0 : index
    %c0_0 = arith.constant 0 : index
    %0 = vector.load %arg1[%c0, %c0_0] : memref<8x32xf32, #tpu.memory_space<vmem>>, vector<8x32xf32>
    %c0_1 = arith.constant 0 : index
    %c0_2 = arith.constant 0 : index
    %1 = vector.load %arg2[%c0_1, %c0_2] : memref<32x16xf32, #tpu.memory_space<vmem>>, vector<32x16xf32>
    %cst = arith.constant dense<0.000000e+00> : vector<8x16xf32>
    %2 = tpu.matmul %0, %1, %cst {dimension_numbers = #tpu.dot_dimension_numbers<[1], [0], [0], [1], [0, 0, 1, 1], [], []>} : vector<8x32xf32>, vector<32x16xf32>, vector<8x16xf32> -> vector<8x16xf32>
    %c0_3 = arith.constant 0 : index
    %c0_4 = arith.constant 0 : index
    %3 = vector.load %arg3[%c0_3, %c0_4] : memref<1x16xf32, #tpu.memory_space<vmem>>, vector<1x16xf32>
    %4 = vector.broadcast %3 : vector<1x16xf32> to vector<8x16xf32>
    %5 = arith.addf %2, %4 : vector<8x16xf32>
    %cst_5 = arith.constant dense<0xFF800000> : vector<8xf32>
    %6 = vector.multi_reduction <maximumf>, %5, %cst_5 [1] : vector<8x16xf32> to vector<8xf32>
    %7 = vector.shape_cast %6 : vector<8xf32> to vector<8x1xf32>
    %8 = vector.broadcast %7 : vector<8x1xf32> to vector<8x16xf32>
    %9 = arith.subf %5, %8 : vector<8x16xf32>
    %10 = math.exp %9 : vector<8x16xf32>
    %cst_6 = arith.constant dense<0.000000e+00> : vector<8xf32>
    %11 = vector.multi_reduction <add>, %10, %cst_6 [1] : vector<8x16xf32> to vector<8xf32>
    %12 = vector.shape_cast %11 : vector<8xf32> to vector<8x1xf32>
    %13 = math.log %12 : vector<8x1xf32>
    %14 = vector.broadcast %13 : vector<8x1xf32> to vector<8x16xf32>
    %15 = arith.subf %9, %14 : vector<8x16xf32>
    %c0_7 = arith.constant 0 : index
    %c0_8 = arith.constant 0 : index
    %16 = vector.load %arg4[%c0_7, %c0_8] : memref<8x16xf32, #tpu.memory_space<vmem>>, vector<8x16xf32>
    tpu.vector_store %arg4[%c0_7, %c0_8], %15 {strides = array<i32>} : memref<8x16xf32, #tpu.memory_space<vmem>>, vector<8x16xf32>,
    return
  }
  func.func @transform_0(%arg0: i32) -> (i32, i32) {
    %c0_i32 = arith.constant 0 : i32
    %c0_i32_0 = arith.constant 0 : i32
    return %arg0, %c0_i32 : i32, i32
  }
  func.func @transform_1(%arg0: i32) -> (i32, i32) {
    %c0_i32 = arith.constant 0 : i32
    %c0_i32_0 = arith.constant 0 : i32
    %c0_i32_1 = arith.constant 0 : i32
    return %c0_i32, %c0_i32_0 : i32, i32
  }
  func.func @transform_2(%arg0: i32) -> (i32, i32) {
    %c0_i32 = arith.constant 0 : i32
    %c0_i32_0 = arith.constant 0 : i32
    %c0_i32_1 = arith.constant 0 : i32
    return %c0_i32, %c0_i32_0 : i32, i32
  }
  func.func @transform_3(%arg0: i32) -> (i32, i32) {
    %c0_i32 = arith.constant 0 : i32
    %c0_i32_0 = arith.constant 0 : i32
    return %arg0, %c0_i32 : i32, i32
  }
}

</mosaic_0001>

<llo_original>
// kernel: tpu_custom_call.1
$region0: #{tpu_custom_call.1}
  #allocation0 [shape = 'u32[]', space=smem, size = 0x4, offset = 0x4, fixed_abs, tag = 'smem constant byte address 0x4 - core index']
  #allocation1 [shape = 'u32[144,128]{1,0:T(1,128)}', space=vmem, size = 0x12000, scoped, tag = 'internal scratch']
  %s0 = inlined_call_operand.vmem [shape: f32[8,32], index: 0, kind: input, shape index: {}]
  %s1 = inlined_call_operand.vmem [shape: f32[32,16], index: 1, kind: input, shape index: {}]
  %s2 = inlined_call_operand.vmem [shape: f32[1,16], index: 2, kind: input, shape index: {}]
  %s3 = inlined_call_operand.hbm [shape: f32[8,16], index: 3, kind: output, shape index: {}]
  %s4 = sld [smem:[#allocation0]]
  $region22: #{tpu_custom_call.1} parent=0
    _
  %s6 = ssub.s32 1, %s4
  %s7 = scalar_select 0, %s6, %s4
  $region1: #{tpu_custom_call.1} parent=0
    #allocation2 [shape = 'u8[4096]{0}', space=vmem, size = 0x1000, scoped, tag = 'output window, operand 0, single buffered']
    #allocation3 [shape = 's32[1]{0}', space=sflag, size = 0x4, scoped, tag = 'scoped memory for tpu_custom_call.1']
    %8 = vsyncpa [#allocation3], 0
    // Predicated region
    $region2: #{tpu_custom_call.1} parent=1 // pred_check
      _
    $region3: #{tpu_custom_call.1} parent=1 // pred_check_branch
      %10 = sbr.rel (0) target = $region5
    $region4: #{tpu_custom_call.1} parent=1 // pred_region
      _
    $region5: #{tpu_custom_call.1} parent=1 // pred_fallthru
      _
    // Predicated region
    $region6: #{tpu_custom_call.1} parent=1 // pred_check
      _
    $region7: #{tpu_custom_call.1} parent=1 // pred_check_branch
      %12 = sbr.rel (0) target = $region9
    $region8: #{tpu_custom_call.1} parent=1 // pred_region
      _
    $region9: #{tpu_custom_call.1} parent=1 // pred_fallthru
      _
    // Predicated region
    $region10: #{tpu_custom_call.1} parent=1 // pred_check
      _
    $region11: #{tpu_custom_call.1} parent=1 // pred_check_branch
      %14 = sbr.rel (0) target = $region13
    $region12: #{tpu_custom_call.1} parent=1 // pred_region
      _
    $region13: #{tpu_custom_call.1} parent=1 // pred_fallthru
      _
    %v15 = vld [vmem:[%s0] sm:$0xff]
    %v16 = vld [vmem:[%s1] sm:$0xff]
    %v17 = vld [vmem:[%s1 + $0x8] sm:$0xff]
    %v18 = vld [vmem:[%s1 + $0x10] sm:$0xff]
    %v19 = vld [vmem:[%s1 + $0x18] sm:$0xff]
    %v20 = vld [vmem:[%s2] sm:$0x1]
    %v22 = vlaneseq
    %v23 = vshrl.u32 %v22, 7
    %v24 = vsub.s32 0, %v23
    %v25 = vrot.slane %v20, %v24
    %vm27 = vcmask 261120
    %v29 = vsel %vm27, %v15, 0
    %31 = vmatprep.subr.mxu0 0.0
    %32 = vmatpush1.msra.mxu0 %v16
    %33 = vmatprep.subr.mxu0 0.0
    %34 = vmatpush1.msra.mxu0 %v17
    %35 = vmatprep.subr.mxu0 0.0
    %36 = vmatpush1.msra.mxu0 %v18
    %37 = vmatprep.subr.mxu0 0.0
    %38 = vmatpush1.msra.mxu0 %v19
    %39 = vmatprep.subr.mxu0 0.0
    %40 = vmatpush1.msra.mxu0 0.0
    %41 = vmatprep.subr.mxu0 0.0
    %42 = vmatpush1.msra.mxu0 0.0
    %43 = vmatprep.subr.mxu0 0.0
    %44 = vmatpush1.msra.mxu0 0.0
    %45 = vmatprep.subr.mxu0 0.0
    %46 = vmatpush1.msra.mxu0 0.0
    %47 = vmatprep.subr.mxu0 0.0
    %48 = vmatpush1.msra.mxu0 0.0
    %49 = vmatprep.subr.mxu0 0.0
    %50 = vmatpush1.msra.mxu0 0.0
    %51 = vmatprep.subr.mxu0 0.0
    %52 = vmatpush1.msra.mxu0 0.0
    %53 = vmatprep.subr.mxu0 0.0
    %54 = vmatpush1.msra.mxu0 0.0
    %55 = vmatprep.subr.mxu0 0.0
    %56 = vmatpush1.msra.mxu0 0.0
    %57 = vmatprep.subr.mxu0 0.0
    %58 = vmatpush1.msra.mxu0 0.0
    %59 = vmatprep.subr.mxu0 0.0
    %60 = vmatpush1.msra.mxu0 0.0
    %61 = vmatprep.subr.mxu0 0.0
    %62 = vmatpush1.msra.mxu0 0.0
    %63 = vmatprep.subr.mxu0 0.0
    %64 = vmatpush1.msra.mxu0 0.0
    %65 = vmatprep.subr.mxu0 0.0
    %66 = vmatpush1.msra.mxu0 0.0
    %67 = vmatprep.subr.mxu0 0.0
    %68 = vmatpush1.msra.mxu0 0.0
    %69 = vmatprep.subr.mxu0 0.0
    %70 = vmatpush1.msra.mxu0 0.0
    %71 = vmatprep.subr.mxu0 0.0
    %72 = vmatpush1.msra.mxu0 0.0
    %73 = vmatprep.subr.mxu0 0.0
    %74 = vmatpush1.msra.mxu0 0.0
    %75 = vmatprep.subr.mxu0 0.0
    %76 = vmatpush1.msra.mxu0 0.0
    %77 = vmatprep.subr.mxu0 0.0
    %78 = vmatpush1.msra.mxu0 0.0
    %79 = vmatprep.subr.mxu0 0.0
    %80 = vmatpush1.msra.mxu0 0.0
    %81 = vmatprep.subr.mxu0 0.0
    %82 = vmatpush1.msra.mxu0 0.0
    %83 = vmatprep.subr.mxu0 0.0
    %84 = vmatpush1.msra.mxu0 0.0
    %85 = vmatprep.subr.mxu0 0.0
    %86 = vmatpush1.msra.mxu0 0.0
    %87 = vmatprep.subr.mxu0 0.0
    %88 = vmatpush1.msra.mxu0 0.0
    %89 = vmatprep.subr.mxu0 0.0
    %90 = vmatpush1.msra.mxu0 0.0
    %91 = vmatprep.subr.mxu0 0.0
    %92 = vmatpush1.msra.mxu0 0.0
    %93 = vmatprep.subr.mxu0 0.0
    %94 = vmatpush1.msra.mxu0 0.0
    %95 = vmatprep.mubr.f32.mxu0 0.0
    %96 = vmatmul.mubr.f32.gmra.mrb[0].mxu0 %v29
    %v97 = vpop.f32.mrb[0].mxu0
    %v98 = vadd.f32 %v25, %v97
    %v99 = vpop.f32.mrb[0].mxu0
    %100 = vdwg.mxu0
    %vm101 = vcmask 130048
    %v102 = vsel %vm101, %v98, -inf
    %103 = vmax.xlane.f32.xlu0 %v102
    %v104 = vpop.xlane.xlu0 %103
    %v105 = vsub.f32 %v98, %v104
    %v106 = vmul.f32 %v105, 1.442695
    %v107 = vpow.pop %v106
    %v108 = vsel %vm101, %v107, 0.0
    %109 = vadd.xlane.f32.xlu0 %v108
    %v110 = vpop.xlane.xlu0 %109
    %v111 = vlog2.pop %v110
    %v112 = vmul.f32 %v111, 0.6931472
    %v113 = vsub.f32 %v105, %v112
    %114 = vst.msk [vmem:[#allocation2] sm:$0xff] %vm101, %v113
    // Predicated region
    $region14: #{tpu_custom_call.1} parent=1 // pred_check
      _
    $region15: #{tpu_custom_call.1} parent=1 // pred_check_branch
      %116 = sbr.rel (0) target = $region17
    $region16: #{tpu_custom_call.1} parent=1 // pred_region
      %s118 = ssub.s32 128, 128
      %119 = vsyncadd [#allocation3], %s118
      %s121 = sshll.u32 [#allocation2], 4
      %s122 = int_to_ptr.vmem [resolvable:$true] %s121
      %124 = dma.vmem_to_hbm [thread:$0]  %s122, 128, %s3, [#allocation3]
    $region17: #{tpu_custom_call.1} parent=1 // pred_fallthru
      _
    // Predicated region
    $region18: #{tpu_custom_call.1} parent=1 // pred_check
      _
    $region19: #{tpu_custom_call.1} parent=1 // pred_check_branch
      %126 = sbr.rel (0) target = $region21
    $region20: #{tpu_custom_call.1} parent=1 // pred_region
      %127 = dma.done [#allocation3], 128
    $region21: #{tpu_custom_call.1} parent=1 // pred_fallthru
      _
    %128 = vsyncpa [#allocation3], 1

</llo_original>
